<compile_context>
chip_gen: v5e
topology: v5e:2x2
jax: 0.10.0
libtpu: 0.0.40
codegen_flags: <defaults>
</compile_context>

<pallas_src>
import functools

import jax
import jax.numpy as jnp
from jax import lax
from jax.experimental import pallas as pl
from jax.experimental.pallas import tpu as pltpu


def _series_decomp_kernel(x_ref, res_ref, mean_ref, *, kernel_size, pad, seq_len,
                          use_prefix_sum):
    """One (batch, channel-tile) block. x_ref/res_ref/mean_ref: (1, L, CT)."""
    L = seq_len
    x32 = x_ref[...].astype(jnp.float32)                      # single tile load
    row = lax.broadcasted_iota(jnp.int32, x32.shape, dimension=1)   # time index

    # Replicate-padding edge rows, loaded once and pre-broadcast (hoisted).
    first_b = jnp.broadcast_to(
        x_ref[:, pl.ds(0, 1), :].astype(jnp.float32), x32.shape)
    last_b = jnp.broadcast_to(
        x_ref[:, pl.ds(L - 1, 1), :].astype(jnp.float32), x32.shape)

    if not use_prefix_sum:
        # Direct O(K) path: accumulate 2*pad shifted copies built with XLU
        # rolls of the already-loaded tile (no misaligned VMEM re-loads).
        acc = x32                                              # shift s == 0
        for s in range(1, pad + 1):
            # term_plus[t]  = x[min(t + s, L - 1)]
            rolled_p = pltpu.roll(x32, shift=(-s) % L, axis=1)
            acc = acc + jnp.where(row < L - s, rolled_p, last_b)
            # term_minus[t] = x[max(t - s, 0)]
            rolled_m = pltpu.roll(x32, shift=s % L, axis=1)
            acc = acc + jnp.where(row >= s, rolled_m, first_b)
        window_sum = acc
    else:
        # O(log L) path for large windows: prefix sum along time, then the
        # window sum is a cumsum difference plus the clamped-edge contributions.
        cs = x32
        d = 1
        while d < L:
            cs = cs + jnp.where(row >= d, pltpu.roll(cs, shift=d, axis=1), 0.0)
            d *= 2
        cs_total = jnp.broadcast_to(jnp.sum(x32, axis=1, keepdims=True), cs.shape)
        # upper[t] = cs[min(t + pad, L - 1)]
        upper = jnp.where(row < L - pad,
                          pltpu.roll(cs, shift=(-pad) % L, axis=1), cs_total)
        # lower[t] = cs[t - pad - 1] if t - pad - 1 >= 0 else 0
        lower = jnp.where(row >= pad + 1,
                          pltpu.roll(cs, shift=(pad + 1) % L, axis=1), 0.0)
        w_front = jnp.maximum(pad - row, 0).astype(jnp.float32)
        w_back = jnp.maximum(row - (L - 1 - pad), 0).astype(jnp.float32)
        window_sum = (upper - lower) + w_front * first_b + w_back * last_b

    mean = window_sum * (1.0 / kernel_size)
    mean_ref[...] = mean.astype(mean_ref.dtype)
    res_ref[...] = (x32 - mean).astype(res_ref.dtype)          # fused residual


def series_decomp(x, kernel_size, *, use_prefix_sum=None, channel_tile=512):
    """Series decomposition: returns (res, moving_mean), both shaped like x."""
    if x.ndim != 3:
        raise ValueError(f"expected (batch, seq_len, channels), got {x.shape}")
    B, L, C = x.shape
    if kernel_size < 1 or kernel_size % 2 == 0:
        raise ValueError("series_decomp requires an odd kernel_size (the PyTorch "
                         "module only yields shape-compatible outputs for odd K).")
    pad = (kernel_size - 1) // 2
    if use_prefix_sum is None:
        # Direct accumulation is O(K) vector ops per element; prefix sum is
        # O(log L).  Switch once the window gets large.
        use_prefix_sum = kernel_size >= 16

    # Halo-free channel tiling: caps VMEM for very wide inputs and gives the
    # grid extra parallel steps (v7x megacore).  Block last dim is either the
    # full C or a multiple of 128, so the (8, 128) tiling rule is satisfied.
    ct = C if C <= channel_tile else channel_tile
    num_ct = pl.cdiv(C, ct)

    kernel = functools.partial(
        _series_decomp_kernel,
        kernel_size=kernel_size, pad=pad, seq_len=L, use_prefix_sum=use_prefix_sum)

    res, mean = pl.pallas_call(
        kernel,
        out_shape=(jax.ShapeDtypeStruct((B, L, C), x.dtype),
                   jax.ShapeDtypeStruct((B, L, C), x.dtype)),
        grid_spec=pltpu.PrefetchScalarGridSpec(
            num_scalar_prefetch=0,
            grid=(B, num_ct),
            in_specs=[pl.BlockSpec((1, L, ct), lambda b, c: (b, 0, c))],
            out_specs=[pl.BlockSpec((1, L, ct), lambda b, c: (b, 0, c)),
                       pl.BlockSpec((1, L, ct), lambda b, c: (b, 0, c))],
        ),
        compiler_params=pltpu.CompilerParams(
            dimension_semantics=("parallel", "parallel"),
            vmem_limit_bytes=48 * 1024 * 1024,
        ),
    )(x)
    return res, mean


def _reference(x, kernel_size):
    """Pure-JAX reference mirroring the PyTorch series_decomp.forward."""
    pad = (kernel_size - 1) // 2
    front = jnp.repeat(x[:, 0:1, :], pad, axis=1)
    end = jnp.repeat(x[:, -1:, :], pad, axis=1)
    xp = jnp.concatenate([front, x, end], axis=1)
    L = x.shape[1]
    mean = jnp.stack(
        [jnp.mean(xp[:, t:t + kernel_size, :], axis=1) for t in range(L)], axis=1)
    return x - mean, mean


if __name__ == "__main__":
    key = jax.random.PRNGKey(0)
    # (B, L, C, kernel_size, force_path): covers the direct-roll path (small K),
    # the prefix-sum path (large K), and the direct path with a large window.
    cases = [
        (2, 16, 8, 5, None),
        (2, 48, 8, 25, None),
        (2, 48, 8, 25, False),
    ]
    for i, (B, L, C, K, force) in enumerate(cases):
        key, sub = jax.random.split(key)
        x = jax.random.normal(sub, (B, L, C), dtype=jnp.float32)

        res, mean = series_decomp(x, K, use_prefix_sum=force)
        res, mean = jax.block_until_ready((res, mean))

        res_ref, mean_ref = _reference(x, K)
        assert mean.shape == mean_ref.shape, (i, mean.shape, mean_ref.shape)
        assert res.shape == res_ref.shape, (i, res.shape, res_ref.shape)
        assert jnp.allclose(mean, mean_ref, atol=1e-4, rtol=1e-4), f"mean mismatch, case {i}"
        assert jnp.allclose(res, res_ref, atol=1e-4, rtol=1e-4), f"res mismatch, case {i}"

    print("KERNEL_OK")
</pallas_src>

<mosaic_0001>
module attributes {stable_mosaic.version = 11 : i64} {
  func.func @_series_decomp_kernel(%arg0: i32, %arg1: i32, %arg2: memref<1x16x8xf32, #tpu.memory_space<vmem>>, %arg3: memref<1x16x8xf32, #tpu.memory_space<vmem>>, %arg4: memref<1x16x8xf32, #tpu.memory_space<vmem>>) attributes {dimension_semantics = [#tpu.dimension_semantics<parallel>, #tpu.dimension_semantics<parallel>], iteration_bounds = array<i64: 2, 1>, scalar_prefetch = 0 : i64, scratch_operands = 0 : i64, tpu.core_type = #tpu.core_type<tc>, window_params = [{transform_indices = @transform_0, window_bounds = array<i64: 1, 16, 8>}, {transform_indices = @transform_1, window_bounds = array<i64: 1, 16, 8>}, {transform_indices = @transform_2, window_bounds = array<i64: 1, 16, 8>}]} {
    %c0 = arith.constant 0 : index
    %c0_0 = arith.constant 0 : index
    %c0_1 = arith.constant 0 : index
    %0 = vector.load %arg2[%c0, %c0_0, %c0_1] : memref<1x16x8xf32, #tpu.memory_space<vmem>>, vector<1x16x8xf32>
    %1 = tpu.iota {dimensions = array<i32: 1>} : vector<1x16x8xi32>
    %c0_2 = arith.constant 0 : index
    %c0_3 = arith.constant 0 : index
    %c0_4 = arith.constant 0 : index
    %2 = vector.load %arg2[%c0_2, %c0_3, %c0_4] : memref<1x16x8xf32, #tpu.memory_space<vmem>>, vector<1x1x8xf32>
    %3 = vector.shape_cast %2 : vector<1x1x8xf32> to vector<1x1x8xf32>
    %4 = vector.broadcast %3 : vector<1x1x8xf32> to vector<1x16x8xf32>
    %c0_5 = arith.constant 0 : index
    %c15 = arith.constant 15 : index
    %c0_6 = arith.constant 0 : index
    %5 = vector.load %arg2[%c0_5, %c15, %c0_6] : memref<1x16x8xf32, #tpu.memory_space<vmem>>, vector<1x1x8xf32>
    %6 = vector.shape_cast %5 : vector<1x1x8xf32> to vector<1x1x8xf32>
    %7 = vector.broadcast %6 : vector<1x1x8xf32> to vector<1x16x8xf32>
    %c15_i32 = arith.constant 15 : i32
    %8 = tpu.dynamic_rotate %0 by %c15_i32 dim 1 : vector<1x16x8xf32>, i32 -> vector<1x16x8xf32>
    %c15_i32_7 = arith.constant 15 : i32
    %9 = vector.broadcast %c15_i32_7 : i32 to vector<1x16x8xi32>
    %10 = arith.cmpi slt, %1, %9 : vector<1x16x8xi32>
    %11 = arith.select %10, %8, %7 : vector<1x16x8xi1>, vector<1x16x8xf32>
    %12 = arith.addf %0, %11 : vector<1x16x8xf32>
    %c1_i32 = arith.constant 1 : i32
    %13 = tpu.dynamic_rotate %0 by %c1_i32 dim 1 : vector<1x16x8xf32>, i32 -> vector<1x16x8xf32>
    %c1_i32_8 = arith.constant 1 : i32
    %14 = vector.broadcast %c1_i32_8 : i32 to vector<1x16x8xi32>
    %15 = arith.cmpi sge, %1, %14 : vector<1x16x8xi32>
    %16 = arith.select %15, %13, %4 : vector<1x16x8xi1>, vector<1x16x8xf32>
    %17 = arith.addf %12, %16 : vector<1x16x8xf32>
    %c14_i32 = arith.constant 14 : i32
    %18 = tpu.dynamic_rotate %0 by %c14_i32 dim 1 : vector<1x16x8xf32>, i32 -> vector<1x16x8xf32>
    %c14_i32_9 = arith.constant 14 : i32
    %19 = vector.broadcast %c14_i32_9 : i32 to vector<1x16x8xi32>
    %20 = arith.cmpi slt, %1, %19 : vector<1x16x8xi32>
    %21 = arith.select %20, %18, %7 : vector<1x16x8xi1>, vector<1x16x8xf32>
    %22 = arith.addf %17, %21 : vector<1x16x8xf32>
    %c2_i32 = arith.constant 2 : i32
    %23 = tpu.dynamic_rotate %0 by %c2_i32 dim 1 : vector<1x16x8xf32>, i32 -> vector<1x16x8xf32>
    %c2_i32_10 = arith.constant 2 : i32
    %24 = vector.broadcast %c2_i32_10 : i32 to vector<1x16x8xi32>
    %25 = arith.cmpi sge, %1, %24 : vector<1x16x8xi32>
    %26 = arith.select %25, %23, %4 : vector<1x16x8xi1>, vector<1x16x8xf32>
    %27 = arith.addf %22, %26 : vector<1x16x8xf32>
    %cst = arith.constant 2.000000e-01 : f32
    %28 = vector.broadcast %cst : f32 to vector<1x16x8xf32>
    %29 = arith.mulf %27, %28 : vector<1x16x8xf32>
    %c0_11 = arith.constant 0 : index
    %c0_12 = arith.constant 0 : index
    %c0_13 = arith.constant 0 : index
    %30 = vector.load %arg4[%c0_11, %c0_12, %c0_13] : memref<1x16x8xf32, #tpu.memory_space<vmem>>, vector<1x16x8xf32>
    tpu.vector_store %arg4[%c0_11, %c0_12, %c0_13], %29 {strides = array<i32>} : memref<1x16x8xf32, #tpu.memory_space<vmem>>, vector<1x16x8xf32>,
    %31 = arith.subf %0, %29 : vector<1x16x8xf32>
    %c0_14 = arith.constant 0 : index
    %c0_15 = arith.constant 0 : index
    %c0_16 = arith.constant 0 : index
    %32 = vector.load %arg3[%c0_14, %c0_15, %c0_16] : memref<1x16x8xf32, #tpu.memory_space<vmem>>, vector<1x16x8xf32>
    tpu.vector_store %arg3[%c0_14, %c0_15, %c0_16], %31 {strides = array<i32>} : memref<1x16x8xf32, #tpu.memory_space<vmem>>, vector<1x16x8xf32>,
    return
  }
  func.func @transform_0(%arg0: i32, %arg1: i32) -> (i32, i32, i32) {
    %c0_i32 = arith.constant 0 : i32
    %c0_i32_0 = arith.constant 0 : i32
    return %arg0, %c0_i32, %arg1 : i32, i32, i32
  }
  func.func @transform_1(%arg0: i32, %arg1: i32) -> (i32, i32, i32) {
    %c0_i32 = arith.constant 0 : i32
    %c0_i32_0 = arith.constant 0 : i32
    return %arg0, %c0_i32, %arg1 : i32, i32, i32
  }
  func.func @transform_2(%arg0: i32, %arg1: i32) -> (i32, i32, i32) {
    %c0_i32 = arith.constant 0 : i32
    %c0_i32_0 = arith.constant 0 : i32
    return %arg0, %c0_i32, %arg1 : i32, i32, i32
  }
}

</mosaic_0001>

<llo_original>
// kernel: tpu_custom_call.1
$region0: #{tpu_custom_call.1}
  #allocation0 [shape = 'u32[]', space=smem, size = 0x4, offset = 0x4, fixed_abs, tag = 'smem constant byte address 0x4 - core index']
  #allocation1 [shape = 'u32[72,128]{1,0:T(1,128)}', space=vmem, size = 0x9000, scoped, tag = 'internal scratch']
  %s0 = inlined_call_operand.vmem [shape: f32[2,16,8], index: 0, kind: input, shape index: {}]
  %s1 = inlined_call_operand.vmem [shape: f32[2,16,8], index: 1, kind: output, shape index: {0}]
  %s2 = inlined_call_operand.vmem [shape: f32[2,16,8], index: 2, kind: output, shape index: {1}]
  %3 = xla_tuple %s1, %s2
  %s4 = sld [smem:[#allocation0]]
  $region45: #{tpu_custom_call.1} parent=0
    _
  %s6 = ssub.s32 1, %s4
  %s7 = scalar_select 0, %s6, %s4
  loop: start=0, step=1, limit=4
  $region2: #{tpu_custom_call.1} parent=0 // loop_pre_header
    _
  $region3: #{tpu_custom_call.1} parent=0 // loop_header
    %s9 = sphi 0, %s13
    %p10 = scmp.ge.s32.totalorder %s9, 4
    %s16 = sphi 0, %s28
    %s17 = sphi 0, %s24
    %s18 = sphi 0, %s16
    %s19 = sphi 0, %s17
    %s20 = sphi 0, %s18
    %s21 = sphi 0, %s19
    %s33 = sphi 0, %s35
    %s36 = sphi 0, %s33
    %s37 = sphi 0, %s36
    %s53 = sphi 0, %s37
    %s61 = sphi 0, %s63
    %s64 = sphi 0, %s61
    %s65 = sphi 0, %s64
    %s81 = sphi 0, %s65
    %s89 = sphi 0, %s91
    %s92 = sphi 0, %s89
    %s93 = sphi 0, %s92
    %s109 = sphi 0, %s93
  $region4: #{tpu_custom_call.1} parent=0 // loop_header_branch
    %12 = sbr.rel (%p10) target = $region8
  $region5: #{tpu_custom_call.1} parent=0 // loop_body
    %s14 = ssub.s32 %s9, 1
    %s15 = ssub.s32 %s9, 2
    %s22 = sadd.s32 1, %s17
    %p23 = scmp.ge.s32.totalorder %s22, 1
    %s24 = scalar_select %p23, 0, %s22
    %s25 = sadd.s32 1, %s16
    %s26 = scalar_select %p23, %s25, %s16
    %p27 = scmp.ge.s32.totalorder %s26, 2
    %s28 = scalar_select %p27, 0, %s26
    %s29 = ssub.s32 %s16, %s28
    %s30 = ssub.s32 %s17, %s24
    %s31 = sor.u32 %s29, %s30
    %p32 = scmp.eq.s32.totalorder %s31, 0
    %s34 = sadd.s32 %s33, 1
    %s35 = scalar_select %p32, %s33, %s34
    %p38 = pneg %p32
    %p39 = scmp.eq.s32.totalorder %s9, 1
    %p40 = por %p38, %p39
    %p41 = scmp.ne.s32.totalorder %s33, %s36
    %p42 = scmp.eq.s32.totalorder %s9, 0
    %p43 = por %p41, %p42
    %p44 = scmp.ne.s32.totalorder %s33, %s36
    %p45 = scmp.eq.s32.totalorder %s14, 1
    %p46 = por %p44, %p45
    %p47 = scmp.ne.s32.totalorder %s36, %s37
    %p48 = scmp.eq.s32.totalorder %s14, 0
    %p49 = por %p47, %p48
    %p50 = scmp.ne.s32.totalorder %s36, %s37
    %p51 = scmp.eq.s32.totalorder %s15, 1
    %p52 = por %p50, %p51
    %p54 = scmp.ne.s32.totalorder %s37, %s53
    %p55 = scmp.eq.s32.totalorder %s15, 0
    %p56 = por %p54, %p55
    %s57 = ssub.s32 %s16, %s28
    %s58 = ssub.s32 %s17, %s24
    %s59 = sor.u32 %s57, %s58
    %p60 = scmp.eq.s32.totalorder %s59, 0
    %s62 = sadd.s32 %s61, 1
    %s63 = scalar_select %p60, %s61, %s62
    %p66 = pneg %p60
    %p67 = scmp.eq.s32.totalorder %s9, 1
    %p68 = por %p66, %p67
    %p69 = scmp.ne.s32.totalorder %s61, %s64
    %p70 = scmp.eq.s32.totalorder %s9, 0
    %p71 = por %p69, %p70
    %p72 = scmp.ne.s32.totalorder %s61, %s64
    %p73 = scmp.eq.s32.totalorder %s14, 1
    %p74 = por %p72, %p73
    %p75 = scmp.ne.s32.totalorder %s64, %s65
    %p76 = scmp.eq.s32.totalorder %s14, 0
    %p77 = por %p75, %p76
    %p78 = scmp.ne.s32.totalorder %s64, %s65
    %p79 = scmp.eq.s32.totalorder %s15, 1
    %p80 = por %p78, %p79
    %p82 = scmp.ne.s32.totalorder %s65, %s81
    %p83 = scmp.eq.s32.totalorder %s15, 0
    %p84 = por %p82, %p83
    %s85 = ssub.s32 %s16, %s28
    %s86 = ssub.s32 %s17, %s24
    %s87 = sor.u32 %s85, %s86
    %p88 = scmp.eq.s32.totalorder %s87, 0
    %s90 = sadd.s32 %s89, 1
    %s91 = scalar_select %p88, %s89, %s90
    %p94 = pneg %p88
    %p95 = scmp.eq.s32.totalorder %s9, 1
    %p96 = por %p94, %p95
    %p97 = scmp.ne.s32.totalorder %s89, %s92
    %p98 = scmp.eq.s32.totalorder %s9, 0
    %p99 = por %p97, %p98
    %p100 = scmp.ne.s32.totalorder %s89, %s92
    %p101 = scmp.eq.s32.totalorder %s14, 1
    %p102 = por %p100, %p101
    %p103 = scmp.ne.s32.totalorder %s92, %s93
    %p104 = scmp.eq.s32.totalorder %s14, 0
    %p105 = por %p103, %p104
    %p106 = scmp.ne.s32.totalorder %s92, %s93
    %p107 = scmp.eq.s32.totalorder %s15, 1
    %p108 = por %p106, %p107
    %p110 = scmp.ne.s32.totalorder %s93, %s109
    %p111 = scmp.eq.s32.totalorder %s15, 0
    %p112 = por %p110, %p111
    %p113 = scmp.le.s32.totalorder 1, %s9
    %p114 = scmp.lt.s32.totalorder %s9, 3
    %p115 = pnand %p113, %p114
    %p116 = pneg %p115
    // Predicated region
    $region9: #{tpu_custom_call.1} parent=5 // pred_check
      _
    $region10: #{tpu_custom_call.1} parent=5 // pred_check_branch
      %118 = sbr.rel (%p115) target = $region12
    $region11: #{tpu_custom_call.1} parent=5 // pred_region
      %s119 = ssub.s32 %s9, 1
    $region12: #{tpu_custom_call.1} parent=5 // pred_fallthru
      _
    %p120 = scmp.lt.s32.totalorder %s9, 2
    // Predicated region
    $region13: #{tpu_custom_call.1} parent=5 // pred_check
      %p121 = pneg %p120
    $region14: #{tpu_custom_call.1} parent=5 // pred_check_branch
      %123 = sbr.rel (%p121) target = $region16
    $region15: #{tpu_custom_call.1} parent=5 // pred_region
      // Predicated region
      $region17: #{tpu_custom_call.1} parent=15 // pred_check
        %p124 = pneg %p43
      $region18: #{tpu_custom_call.1} parent=15 // pred_check_branch
        %126 = sbr.rel (%p124) target = $region20
      $region19: #{tpu_custom_call.1} parent=15 // pred_region
        %p127 = scmp.lt.s32.totalorder %s16, 1
        %s128 = scalar_select %p127, %s16, 1
        %p129 = scmp.lt.s32.totalorder %s17, 0
        %s130 = scalar_select %p129, %s17, 0
        %s131 = smul.addr %s128, 2
        %s132 = sadd.s32 %s130, %s131
        %s133 = smul.addr %s132, 8
        %s134 = scalar_lea.vmem %s0, %s133
      $region20: #{tpu_custom_call.1} parent=15 // pred_fallthru
        _
    $region16: #{tpu_custom_call.1} parent=5 // pred_fallthru
      _
    %p135 = scmp.le.s32.totalorder 1, %s9
    %p136 = scmp.lt.s32.totalorder %s9, 3
    %p137 = pnand %p135, %p136
    %p138 = pneg %p137
    // Predicated region
    $region21: #{tpu_custom_call.1} parent=5 // pred_check
      _
    $region22: #{tpu_custom_call.1} parent=5 // pred_check_branch
      %140 = sbr.rel (%p137) target = $region24
    $region23: #{tpu_custom_call.1} parent=5 // pred_region
      %s141 = ssub.s32 %s9, 1
      %p142 = scmp.lt.s32.totalorder %s18, 1
      %s143 = scalar_select %p142, %s18, 1
      %p144 = scmp.lt.s32.totalorder %s19, 0
      %s145 = scalar_select %p144, %s19, 0
      %s146 = smul.addr %s143, 2
      %s147 = sadd.s32 %s145, %s146
      %s148 = smul.addr %s147, 8
      %s149 = scalar_lea.vmem %s0, %s148
      %p150 = pneg %p49
      %p151 = pneg %p46
      %p152 = pneg %p77
      %p153 = pneg %p74
      %p154 = scmp.lt.s32.totalorder %s18, 1
      %s155 = scalar_select %p154, %s18, 1
      %p156 = scmp.lt.s32.totalorder %s19, 0
      %s157 = scalar_select %p156, %s19, 0
      %s158 = smul.addr %s155, 2
      %s159 = sadd.s32 %s157, %s158
      %s160 = smul.addr %s159, 8
      %s161 = scalar_lea.vmem %s1, %s160
      %p162 = pneg %p105
      %p163 = pneg %p102
      %p164 = scmp.lt.s32.totalorder %s18, 1
      %s165 = scalar_select %p164, %s18, 1
      %p166 = scmp.lt.s32.totalorder %s19, 0
      %s167 = scalar_select %p166, %s19, 0
      %s168 = smul.addr %s165, 2
      %s169 = sadd.s32 %s167, %s168
      %s170 = smul.addr %s169, 8
      %s171 = scalar_lea.vmem %s2, %s170
      %p172 = scmp.lt.s32.totalorder %s18, 1
      %s173 = scalar_select %p172, %s18, 1
      %p174 = scmp.lt.s32.totalorder %s19, 0
      %s175 = scalar_select %p174, %s19, 0
      %s176 = smul.addr %s173, 2
      %s177 = sadd.s32 %s175, %s176
      %s178 = smul.addr %s177, 8
      %s179 = scalar_lea.vmem %s0, %s178
      %p180 = scmp.lt.s32.totalorder %s18, 1
      %s181 = scalar_select %p180, %s18, 1
      %p182 = scmp.lt.s32.totalorder %s19, 0
      %s183 = scalar_select %p182, %s19, 0
      %s184 = smul.addr %s181, 2
      %s185 = sadd.s32 %s183, %s184
      %s186 = smul.addr %s185, 8
      %s187 = scalar_lea.vmem %s1, %s186
      %p188 = scmp.lt.s32.totalorder %s18, 1
      %s189 = scalar_select %p188, %s18, 1
      %p190 = scmp.lt.s32.totalorder %s19, 0
      %s191 = scalar_select %p190, %s19, 0
      %s192 = smul.addr %s189, 2
      %s193 = sadd.s32 %s191, %s192
      %s194 = smul.addr %s193, 8
      %s195 = scalar_lea.vmem %s2, %s194
      %v196 = vld [vmem:[%s179] sm:$0xff]
      %v197 = vld [vmem:[%s179 + $0x8] sm:$0xff]
      %v198 = vlaneseq
      %v199 = vshrl.u32 %v198, 7
      %v200 = vadd.s32 %v199, 8
      %v201 = vld [vmem:[%s179] sm:$0x1]
      %v202 = vperm.slane %v201, 0
      %v203 = vld [vmem:[%s179 + $0xf] sm:$0x1]
      %v204 = vperm.slane %v203, 0
      %v205 = vrot.slane %v196, 1
      %v206 = vrot.slane %v197, 1
      %vm207 = vcmp.lt.s32.totalorder %v199, 7
      %v208 = vsel %vm207, %v205, %v206
      %v209 = vsel %vm207, %v206, %v205
      %vm210 = vcmp.lt.s32.totalorder %v199, 15
      %vm211 = vcmp.lt.s32.totalorder %v200, 15
      %v212 = vsel %vm210, %v208, %v204
      %v213 = vsel %vm211, %v209, %v204
      %v214 = vadd.f32 %v196, %v212
      %v215 = vadd.f32 %v197, %v213
      %v216 = vrot.slane %v196, 7
      %v217 = vrot.slane %v197, 7
      %vm218 = vcmp.lt.s32.totalorder %v199, 1
      %v219 = vsel %vm218, %v216, %v217
      %v220 = vsel %vm218, %v217, %v216
      %vm221 = vcmp.ge.s32.totalorder %v199, 1
      %vm222 = vcmp.ge.s32.totalorder %v200, 1
      %v223 = vsel %vm221, %v220, %v202
      %v224 = vsel %vm222, %v219, %v202
      %v225 = vadd.f32 %v214, %v223
      %v226 = vadd.f32 %v215, %v224
      %v227 = vrot.slane %v196, 2
      %v228 = vrot.slane %v197, 2
      %vm229 = vcmp.lt.s32.totalorder %v199, 6
      %v230 = vsel %vm229, %v227, %v228
      %v231 = vsel %vm229, %v228, %v227
      %vm232 = vcmp.lt.s32.totalorder %v199, 14
      %vm233 = vcmp.lt.s32.totalorder %v200, 14
      %v234 = vsel %vm232, %v230, %v204
      %v235 = vsel %vm233, %v231, %v204
      %v236 = vadd.f32 %v225, %v234
      %v237 = vadd.f32 %v226, %v235
      %v238 = vrot.slane %v196, 6
      %v239 = vrot.slane %v197, 6
      %vm240 = vcmp.lt.s32.totalorder %v199, 2
      %v241 = vsel %vm240, %v238, %v239
      %v242 = vsel %vm240, %v239, %v238
      %vm243 = vcmp.ge.s32.totalorder %v199, 2
      %vm244 = vcmp.ge.s32.totalorder %v200, 2
      %v245 = vsel %vm243, %v242, %v202
      %v246 = vsel %vm244, %v241, %v202
      %v247 = vadd.f32 %v236, %v245
      %v248 = vadd.f32 %v237, %v246
      %v249 = vmul.f32 %v247, 0.2
      %v250 = vmul.f32 %v248, 0.2
      %vm251 = vcmask 64512
      %252 = vst.msk [vmem:[%s195] sm:$0xff] %vm251, %v249
      %253 = vst.msk [vmem:[%s195 + $0x8] sm:$0xff] %vm251, %v250
      %v254 = vsub.f32 %v196, %v249
      %v255 = vsub.f32 %v197, %v250
      %256 = vst.msk [vmem:[%s187] sm:$0xff] %vm251, %v254
      %257 = vst.msk [vmem:[%s187 + $0x8] sm:$0xff] %vm251, %v255
      %p258 = scmp.lt.s32.totalorder %s18, 1
      %s259 = scalar_select %p258, %s18, 1
      %p260 = scmp.lt.s32.totalorder %s19, 0
      %s261 = scalar_select %p260, %s19, 0
      %s262 = smul.addr %s259, 2
      %s263 = sadd.s32 %s261, %s262
      %s264 = smul.addr %s263, 8
      %s265 = scalar_lea.vmem %s1, %s264
      %p266 = scmp.lt.s32.totalorder %s18, 1
      %s267 = scalar_select %p266, %s18, 1
      %p268 = scmp.lt.s32.totalorder %s19, 0
      %s269 = scalar_select %p268, %s19, 0
      %s270 = smul.addr %s267, 2
      %s271 = sadd.s32 %s269, %s270
      %s272 = smul.addr %s271, 8
      %s273 = scalar_lea.vmem %s2, %s272
      // Predicated region
      $region25: #{tpu_custom_call.1} parent=23 // pred_check
        %p274 = pneg %p74
      $region26: #{tpu_custom_call.1} parent=23 // pred_check_branch
        %276 = sbr.rel (%p274) target = $region28
      $region27: #{tpu_custom_call.1} parent=23 // pred_region
        _
      $region28: #{tpu_custom_call.1} parent=23 // pred_fallthru
        _
      // Predicated region
      $region29: #{tpu_custom_call.1} parent=23 // pred_check
        %p277 = pneg %p102
      $region30: #{tpu_custom_call.1} parent=23 // pred_check_branch
        %279 = sbr.rel (%p277) target = $region32
      $region31: #{tpu_custom_call.1} parent=23 // pred_region
        _
      $region32: #{tpu_custom_call.1} parent=23 // pred_fallthru
        _
    $region24: #{tpu_custom_call.1} parent=5 // pred_fallthru
      _
    %p280 = scmp.le.s32.totalorder 2, %s9
    // Predicated region
    $region33: #{tpu_custom_call.1} parent=5 // pred_check
      %p281 = pneg %p280
    $region34: #{tpu_custom_call.1} parent=5 // pred_check_branch
      %283 = sbr.rel (%p281) target = $region36
    $region35: #{tpu_custom_call.1} parent=5 // pred_region
      %s284 = ssub.s32 %s9, 2
      // Predicated region
      $region37: #{tpu_custom_call.1} parent=35 // pred_check
        %p285 = pneg %p80
      $region38: #{tpu_custom_call.1} parent=35 // pred_check_branch
        %287 = sbr.rel (%p285) target = $region40
      $region39: #{tpu_custom_call.1} parent=35 // pred_region
        %p288 = scmp.lt.s32.totalorder %s20, 1
        %s289 = scalar_select %p288, %s20, 1
        %p290 = scmp.lt.s32.totalorder %s21, 0
        %s291 = scalar_select %p290, %s21, 0
        %s292 = smul.addr %s289, 2
        %s293 = sadd.s32 %s291, %s292
        %s294 = smul.addr %s293, 8
        %s295 = scalar_lea.vmem %s1, %s294
      $region40: #{tpu_custom_call.1} parent=35 // pred_fallthru
        _
      // Predicated region
      $region41: #{tpu_custom_call.1} parent=35 // pred_check
        %p296 = pneg %p108
      $region42: #{tpu_custom_call.1} parent=35 // pred_check_branch
        %298 = sbr.rel (%p296) target = $region44
      $region43: #{tpu_custom_call.1} parent=35 // pred_region
        %p299 = scmp.lt.s32.totalorder %s20, 1
        %s300 = scalar_select %p299, %s20, 1
        %p301 = scmp.lt.s32.totalorder %s21, 0
        %s302 = scalar_select %p301, %s21, 0
        %s303 = smul.addr %s300, 2
        %s304 = sadd.s32 %s302, %s303
        %s305 = smul.addr %s304, 8
        %s306 = scalar_lea.vmem %s2, %s305
      $region44: #{tpu_custom_call.1} parent=35 // pred_fallthru
        _
    $region36: #{tpu_custom_call.1} parent=5 // pred_fallthru
      _
  $region6: #{tpu_custom_call.1} parent=0 // loop_footer
    %s13 = sadd.s32 1, %s9
  $region7: #{tpu_custom_call.1} parent=0 // loop_footer_branch
    %8 = sbr.rel target = $region3
  $region8: #{tpu_custom_call.1} parent=0 // loop_exit
    _

</llo_original>
